<compile_context>
chip_gen: v5e
topology: v5e:2x2
jax: 0.10.0
libtpu: 0.0.40
codegen_flags: <defaults>
</compile_context>

<pallas_src>
import jax
import jax.numpy as jnp
from jax.experimental import pallas as pl
from jax.experimental.pallas import tpu as pltpu


# ----------------------------------------------------------------------------
# Kernel 1: reparameterization MLP, computed once on the [P, H] soft prompt.
#   y = tanh(x @ W1^T + b1) @ W2^T + b2     (weights passed pre-transposed)
# ----------------------------------------------------------------------------
def trans_mlp_pallas(soft_prompt, w1_t, b1, w2_t, b2):
    P, H = soft_prompt.shape

    def kernel(x_ref, w1_ref, b1_ref, w2_ref, b2_ref, o_ref):
        x = x_ref[...].astype(jnp.float32)
        h = jnp.tanh(
            jnp.dot(x, w1_ref[...], preferred_element_type=jnp.float32)
            + b1_ref[...]
        )
        y = (jnp.dot(h, w2_ref[...], preferred_element_type=jnp.float32)
             + b2_ref[...])
        o_ref[...] = y.astype(o_ref.dtype)

    return pl.pallas_call(
        kernel,
        out_shape=jax.ShapeDtypeStruct((P, H), jnp.float32),
        grid=(1,),
        in_specs=[
            pl.BlockSpec((P, H), lambda i: (0, 0)),
            pl.BlockSpec((H, H), lambda i: (0, 0)),
            pl.BlockSpec((1, H), lambda i: (0, 0)),
            pl.BlockSpec((H, H), lambda i: (0, 0)),
            pl.BlockSpec((1, H), lambda i: (0, 0)),
        ],
        out_specs=pl.BlockSpec((P, H), lambda i: (0, 0)),
        compiler_params=pltpu.CompilerParams(
            dimension_semantics=("arbitrary",),
            vmem_limit_bytes=48 * 1024 * 1024,
        ),
    )(soft_prompt, w1_t, b1.reshape(1, H), w2_t, b2.reshape(1, H))


# ----------------------------------------------------------------------------
# Kernel 2: assemble inputs_embeds = concat([prompt, wte[input_ids]], dim=1)
# with the wte gather fused (per-row HBM->VMEM DMAs into the output block).
# ----------------------------------------------------------------------------
def _pick_block_b(B, T, H, itemsize, budget_bytes=24 * 1024 * 1024):
    # Largest divisor of B whose double-buffered output block fits the budget.
    per_row = 2 * T * H * itemsize
    bb = max(1, min(B, budget_bytes // max(per_row, 1)))
    while B % bb:
        bb -= 1
    return int(bb)


def assemble_inputs_embeds_pallas(prompt, wte, input_ids, *, block_b=None):
    """prompt: [P, H] (already reparameterized); wte: [V, H];
    input_ids: [B, S] int32.  Returns [B, P + S, H]."""
    P, H = prompt.shape
    B, S = input_ids.shape
    T = P + S
    out_dtype = wte.dtype
    if block_b is None:
        block_b = _pick_block_b(B, T, H, jnp.dtype(out_dtype).itemsize)
    grid = (B // block_b,)

    def kernel(ids_ref, prompt_ref, wte_ref, o_ref, sem):
        b0 = pl.program_id(0) * block_b

        # Prompt rows: broadcast the already-transformed prompt into rows [:P].
        o_ref[:, :P, :] = jnp.broadcast_to(
            prompt_ref[...].astype(o_ref.dtype), (block_b, P, H)
        )

        # Token rows: gather wte rows straight from HBM into the output VMEM
        # block.  Start every row-DMA before waiting on any of them.
        copies = []
        for i in range(block_b):
            for s in range(S):
                tok = ids_ref[b0 + i, s]
                cp = pltpu.make_async_copy(
                    wte_ref.at[pl.ds(tok, 1), :],        # [1, H] in HBM
                    o_ref.at[i, pl.ds(P + s, 1), :],     # [1, H] in out block
                    sem.at[i, s],
                )
                cp.start()
                copies.append(cp)
        for cp in copies:
            cp.wait()

    return pl.pallas_call(
        kernel,
        out_shape=jax.ShapeDtypeStruct((B, T, H), out_dtype),
        grid_spec=pltpu.PrefetchScalarGridSpec(
            num_scalar_prefetch=1,                       # input_ids -> SMEM
            grid=grid,
            in_specs=[
                pl.BlockSpec((P, H), lambda b, ids: (0, 0)),   # prompt (resident)
                pl.BlockSpec(memory_space=pl.ANY),             # wte stays in HBM
            ],
            out_specs=pl.BlockSpec((block_b, T, H), lambda b, ids: (b, 0, 0)),
            scratch_shapes=[pltpu.SemaphoreType.DMA((block_b, S))],
        ),
        compiler_params=pltpu.CompilerParams(
            # No cross-step dependency anymore -> batch axis can be sharded
            # across TensorCores (v7x) and pipelined freely.
            dimension_semantics=("parallel",),
            vmem_limit_bytes=48 * 1024 * 1024,
        ),
    )(input_ids.astype(jnp.int32), prompt, wte)


# ----------------------------------------------------------------------------
# Parameter preparation (once at load time): pre-transpose Linear weights.
# ----------------------------------------------------------------------------
def prepare_params(wte, soft_prompt, w1, b1, w2, b2):
    return dict(
        wte=wte,
        soft_prompt=soft_prompt,
        w1_t=jnp.asarray(w1).T,   # [in, out]
        b1=b1,
        w2_t=jnp.asarray(w2).T,   # [in, out]
        b2=b2,
    )


# ----------------------------------------------------------------------------
# BaseLine1.forward (deterministic, non-context path), JAX glue around kernels
# ----------------------------------------------------------------------------
def baseline1_forward(params, input_ids, attention_mask, *, reparameterize=True):
    """Reproduces BaseLine1.forward up to (and excluding) the decoder call.
    Returns (inputs_embeds, attention_mask) as handed to `self.decoder(...)`."""
    B, S = input_ids.shape
    P, H = params["soft_prompt"].shape

    # prompt_attn = ones(B, P); eos_token_mask = ones(B, 1)
    prompt_attn = jnp.ones((B, P), dtype=attention_mask.dtype)
    eos_token_mask = jnp.ones((B, 1), dtype=attention_mask.dtype)

    # Reparameterization MLP on the unique [P, H] prompt (once, not per batch).
    if reparameterize:
        prompt = trans_mlp_pallas(
            params["soft_prompt"], params["w1_t"], params["b1"],
            params["w2_t"], params["b2"],
        )
    else:
        prompt = params["soft_prompt"].astype(jnp.float32)

    # Fused: wte gather + prompt broadcast + concat((prompt, tokens), dim=1).
    inputs_embeds = assemble_inputs_embeds_pallas(
        prompt.astype(params["wte"].dtype), params["wte"], input_ids
    )                                                      # [B, P + S, H]

    # attention_mask = cat([prompt_attn, eos_token_mask, attention_mask], 1)
    attention_mask = jnp.concatenate(
        [prompt_attn, eos_token_mask, attention_mask], axis=1
    )                                                      # [B, P + 1 + S]

    # TODO(synk): outputs = decoder(inputs_embeds=..., attention_mask=...)
    return inputs_embeds, attention_mask


# ----------------------------------------------------------------------------
# Pure-JAX reference of the trans MLP (to sanity-check kernel semantics)
# ----------------------------------------------------------------------------
def _trans_ref(x, w1, b1, w2, b2):
    h = jnp.tanh(x @ w1.T + b1)
    return h @ w2.T + b2


if __name__ == "__main__":
    key = jax.random.PRNGKey(0)
    k_wte, k_ids, k_w1, k_b1, k_w2, k_b2 = jax.random.split(key, 6)

    # Small shapes consistent with the module:
    B, S = 2, 8          # batch, input sequence length
    P = 8                # args.prompt_len
    H = 128              # decoder_config.n_embd (hidden)
    V = 256              # vocab size

    # Soft prompt initialized from the first `prompt_len` rows of wte,
    # exactly as in __init__.
    wte = jax.random.normal(k_wte, (V, H), dtype=jnp.float32) * 0.02
    soft_prompt = wte[:P]
    w1 = jax.random.normal(k_w1, (H, H), dtype=jnp.float32) * 0.02
    b1 = jax.random.normal(k_b1, (H,), dtype=jnp.float32) * 0.02
    w2 = jax.random.normal(k_w2, (H, H), dtype=jnp.float32) * 0.02
    b2 = jax.random.normal(k_b2, (H,), dtype=jnp.float32) * 0.02

    params = prepare_params(wte, soft_prompt, w1, b1, w2, b2)

    input_ids = jax.random.randint(k_ids, (B, S), 0, V, dtype=jnp.int32)
    attention_mask = jnp.ones((B, S), dtype=jnp.int32)

    inputs_embeds, attn_out = jax.block_until_ready(
        baseline1_forward(params, input_ids, attention_mask, reparameterize=True)
    )

    # Shape checks (prompt_len + seq, and prompt_len + 1 + seq for the mask).
    assert inputs_embeds.shape == (B, P + S, H), inputs_embeds.shape
    assert attn_out.shape == (B, P + 1 + S), attn_out.shape

    # Numerical checks against pure-JAX references.
    ref_prompt = _trans_ref(soft_prompt, w1, b1, w2, b2)           # [P, H]
    ref_prompt = jnp.broadcast_to(ref_prompt, (B, P, H))
    assert jnp.allclose(inputs_embeds[:, :P, :], ref_prompt,
                        atol=1e-5, rtol=1e-5), "prompt MLP mismatch"

    ref_tokens = jnp.take(wte, input_ids, axis=0)                  # [B, S, H]
    assert jnp.allclose(inputs_embeds[:, P:, :], ref_tokens,
                        atol=1e-6, rtol=1e-6), "fused wte gather mismatch"

    ref_mask = jnp.concatenate(
        [jnp.ones((B, P), jnp.int32), jnp.ones((B, 1), jnp.int32),
         attention_mask], axis=1)
    assert jnp.array_equal(attn_out, ref_mask), "attention mask mismatch"

    print("KERNEL_OK")
</pallas_src>

<mosaic_0001>
module attributes {stable_mosaic.version = 11 : i64} {
  func.func @kernel(%arg0: i32, %arg1: memref<8x128xf32, #tpu.memory_space<vmem>>, %arg2: memref<128x128xf32, #tpu.memory_space<vmem>>, %arg3: memref<1x128xf32, #tpu.memory_space<vmem>>, %arg4: memref<128x128xf32, #tpu.memory_space<vmem>>, %arg5: memref<1x128xf32, #tpu.memory_space<vmem>>, %arg6: memref<8x128xf32, #tpu.memory_space<vmem>>) attributes {dimension_semantics = [#tpu.dimension_semantics<arbitrary>], iteration_bounds = array<i64: 1>, scalar_prefetch = 0 : i64, scratch_operands = 0 : i64, tpu.core_type = #tpu.core_type<tc>, window_params = [{pipeline_mode = #tpu.pipeline_mode<synchronous>, transform_indices = @transform_0, window_bounds = array<i64: 8, 128>}, {pipeline_mode = #tpu.pipeline_mode<synchronous>, transform_indices = @transform_1, window_bounds = array<i64: 128, 128>}, {pipeline_mode = #tpu.pipeline_mode<synchronous>, transform_indices = @transform_2, window_bounds = array<i64: 1, 128>}, {pipeline_mode = #tpu.pipeline_mode<synchronous>, transform_indices = @transform_3, window_bounds = array<i64: 128, 128>}, {pipeline_mode = #tpu.pipeline_mode<synchronous>, transform_indices = @transform_4, window_bounds = array<i64: 1, 128>}, {pipeline_mode = #tpu.pipeline_mode<synchronous>, transform_indices = @transform_5, window_bounds = array<i64: 8, 128>}]} {
    %c0 = arith.constant 0 : index
    %c0_0 = arith.constant 0 : index
    %0 = vector.load %arg1[%c0, %c0_0] : memref<8x128xf32, #tpu.memory_space<vmem>>, vector<8x128xf32>
    %c0_1 = arith.constant 0 : index
    %c0_2 = arith.constant 0 : index
    %1 = vector.load %arg2[%c0_1, %c0_2] : memref<128x128xf32, #tpu.memory_space<vmem>>, vector<128x128xf32>
    %cst = arith.constant dense<0.000000e+00> : vector<8x128xf32>
    %2 = tpu.matmul %0, %1, %cst {dimension_numbers = #tpu.dot_dimension_numbers<[1], [0], [0], [1], [0, 0, 1, 1], [], []>} : vector<8x128xf32>, vector<128x128xf32>, vector<8x128xf32> -> vector<8x128xf32>
    %c0_3 = arith.constant 0 : index
    %c0_4 = arith.constant 0 : index
    %3 = vector.load %arg3[%c0_3, %c0_4] : memref<1x128xf32, #tpu.memory_space<vmem>>, vector<1x128xf32>
    %4 = vector.broadcast %3 : vector<1x128xf32> to vector<8x128xf32>
    %5 = arith.addf %2, %4 : vector<8x128xf32>
    %6 = math.tanh %5 : vector<8x128xf32>
    %c0_5 = arith.constant 0 : index
    %c0_6 = arith.constant 0 : index
    %7 = vector.load %arg4[%c0_5, %c0_6] : memref<128x128xf32, #tpu.memory_space<vmem>>, vector<128x128xf32>
    %cst_7 = arith.constant dense<0.000000e+00> : vector<8x128xf32>
    %8 = tpu.matmul %6, %7, %cst_7 {dimension_numbers = #tpu.dot_dimension_numbers<[1], [0], [0], [1], [0, 0, 1, 1], [], []>} : vector<8x128xf32>, vector<128x128xf32>, vector<8x128xf32> -> vector<8x128xf32>
    %c0_8 = arith.constant 0 : index
    %c0_9 = arith.constant 0 : index
    %9 = vector.load %arg5[%c0_8, %c0_9] : memref<1x128xf32, #tpu.memory_space<vmem>>, vector<1x128xf32>
    %10 = vector.broadcast %9 : vector<1x128xf32> to vector<8x128xf32>
    %11 = arith.addf %8, %10 : vector<8x128xf32>
    %c0_10 = arith.constant 0 : index
    %c0_11 = arith.constant 0 : index
    %12 = vector.load %arg6[%c0_10, %c0_11] : memref<8x128xf32, #tpu.memory_space<vmem>>, vector<8x128xf32>
    tpu.vector_store %arg6[%c0_10, %c0_11], %11 {strides = array<i32>} : memref<8x128xf32, #tpu.memory_space<vmem>>, vector<8x128xf32>,
    return
  }
  func.func @transform_0(%arg0: i32) -> (i32, i32) {
    %c0_i32 = arith.constant 0 : i32
    %c0_i32_0 = arith.constant 0 : i32
    %c0_i32_1 = arith.constant 0 : i32
    return %c0_i32, %c0_i32_0 : i32, i32
  }
  func.func @transform_1(%arg0: i32) -> (i32, i32) {
    %c0_i32 = arith.constant 0 : i32
    %c0_i32_0 = arith.constant 0 : i32
    %c0_i32_1 = arith.constant 0 : i32
    return %c0_i32, %c0_i32_0 : i32, i32
  }
  func.func @transform_2(%arg0: i32) -> (i32, i32) {
    %c0_i32 = arith.constant 0 : i32
    %c0_i32_0 = arith.constant 0 : i32
    %c0_i32_1 = arith.constant 0 : i32
    return %c0_i32, %c0_i32_0 : i32, i32
  }
  func.func @transform_3(%arg0: i32) -> (i32, i32) {
    %c0_i32 = arith.constant 0 : i32
    %c0_i32_0 = arith.constant 0 : i32
    %c0_i32_1 = arith.constant 0 : i32
    return %c0_i32, %c0_i32_0 : i32, i32
  }
  func.func @transform_4(%arg0: i32) -> (i32, i32) {
    %c0_i32 = arith.constant 0 : i32
    %c0_i32_0 = arith.constant 0 : i32
    %c0_i32_1 = arith.constant 0 : i32
    return %c0_i32, %c0_i32_0 : i32, i32
  }
  func.func @transform_5(%arg0: i32) -> (i32, i32) {
    %c0_i32 = arith.constant 0 : i32
    %c0_i32_0 = arith.constant 0 : i32
    %c0_i32_1 = arith.constant 0 : i32
    return %c0_i32, %c0_i32_0 : i32, i32
  }
}

</mosaic_0001>

<llo_original>
// kernel: tpu_custom_call.1
$region0: #{tpu_custom_call.1}
  #allocation0 [shape = 'u32[]', space=smem, size = 0x4, offset = 0x4, fixed_abs, tag = 'smem constant byte address 0x4 - core index']
  #allocation1 [shape = 'u32[72,128]{1,0:T(1,128)}', space=vmem, size = 0x9000, scoped, tag = 'internal scratch']
  %s0 = inlined_call_operand.hbm [shape: f32[8,128], index: 0, kind: input, shape index: {}]
  %s1 = inlined_call_operand.hbm [shape: f32[128,128], index: 1, kind: input, shape index: {}]
  %s2 = inlined_call_operand.vmem [shape: f32[1,128], index: 2, kind: input, shape index: {}]
  %s3 = inlined_call_operand.hbm [shape: f32[128,128], index: 3, kind: input, shape index: {}]
  %s4 = inlined_call_operand.vmem [shape: f32[1,128], index: 4, kind: input, shape index: {}]
  %s5 = inlined_call_operand.hbm [shape: f32[8,128], index: 5, kind: output, shape index: {}]
  %s6 = sld [smem:[#allocation0]]
  $region42: #{tpu_custom_call.1} parent=0
    _
  %s8 = ssub.s32 1, %s6
  %s9 = scalar_select 0, %s8, %s6
  $region1: #{tpu_custom_call.1} parent=0
    #allocation2 [shape = 'u8[4096]{0}', space=vmem, size = 0x1000, scoped, tag = 'input window, operand 0, single buffered']
    #allocation3 [shape = 's32[1]{0}', space=sflag, size = 0x4, scoped, tag = 'scoped memory for tpu_custom_call.1']
    #allocation4 [shape = 's32[1]{0}', space=sflag, size = 0x4, scoped, tag = 'scoped memory for tpu_custom_call.1']
    #allocation5 [shape = 'u8[65536]{0}', space=vmem, size = 0x10000, scoped, tag = 'input window, operand 1, single buffered']
    #allocation6 [shape = 's32[1]{0}', space=sflag, size = 0x4, scoped, tag = 'scoped memory for tpu_custom_call.1']
    #allocation7 [shape = 'u8[65536]{0}', space=vmem, size = 0x10000, scoped, tag = 'input window, operand 3, single buffered']
    #allocation8 [shape = 'u8[4096]{0}', space=vmem, size = 0x1000, scoped, tag = 'output window, operand 0, single buffered']
    %10 = vsyncpa [#allocation3], 0
    %11 = vsyncpa [#allocation6], 0
    %12 = vsyncpa [#allocation4], 0
    // Predicated region
    $region2: #{tpu_custom_call.1} parent=1 // pred_check
      _
    $region3: #{tpu_custom_call.1} parent=1 // pred_check_branch
      %14 = sbr.rel (0) target = $region5
    $region4: #{tpu_custom_call.1} parent=1 // pred_region
      %16 = vsyncadd [#allocation3], 0
      %s18 = sshll.u32 %s0, 4
      %s19 = int_to_ptr.hbm [resolvable:$true] %s18
      %s20 = sshll.u32 [#allocation2], 4
      %s21 = int_to_ptr.vmem [resolvable:$true] %s20
      %23 = dma.hbm_to_vmem [thread:$0]  %s19, 128, %s21, [#allocation3]
    $region5: #{tpu_custom_call.1} parent=1 // pred_fallthru
      _
    // Predicated region
    $region6: #{tpu_custom_call.1} parent=1 // pred_check
      _
    $region7: #{tpu_custom_call.1} parent=1 // pred_check_branch
      %25 = sbr.rel (0) target = $region9
    $region8: #{tpu_custom_call.1} parent=1 // pred_region
      %27 = vsyncadd [#allocation6], 0
      %s28 = sshll.u32 %s1, 4
      %s29 = int_to_ptr.hbm [resolvable:$true] %s28
      %s30 = sshll.u32 [#allocation5], 4
      %s31 = int_to_ptr.vmem [resolvable:$true] %s30
      %36 = dma.hbm_to_vmem [thread:$0]  %s29, 2048, %s31, [#allocation6], 128, 128, 8
    $region9: #{tpu_custom_call.1} parent=1 // pred_fallthru
      _
    // Predicated region
    $region10: #{tpu_custom_call.1} parent=1 // pred_check
      _
    $region11: #{tpu_custom_call.1} parent=1 // pred_check_branch
      %38 = sbr.rel (0) target = $region13
    $region12: #{tpu_custom_call.1} parent=1 // pred_region
      _
    $region13: #{tpu_custom_call.1} parent=1 // pred_fallthru
      _
    // Predicated region
    $region14: #{tpu_custom_call.1} parent=1 // pred_check
      _
    $region15: #{tpu_custom_call.1} parent=1 // pred_check_branch
      %40 = sbr.rel (0) target = $region17
    $region16: #{tpu_custom_call.1} parent=1 // pred_region
      %42 = vsyncadd [#allocation6], 0
      %s43 = sshll.u32 %s3, 4
      %s44 = int_to_ptr.hbm [resolvable:$true] %s43
      %s45 = sshll.u32 [#allocation7], 4
      %s46 = int_to_ptr.vmem [resolvable:$true] %s45
      %51 = dma.hbm_to_vmem [thread:$0]  %s44, 2048, %s46, [#allocation6], 128, 128, 8
    $region17: #{tpu_custom_call.1} parent=1 // pred_fallthru
      _
    // Predicated region
    $region18: #{tpu_custom_call.1} parent=1 // pred_check
      _
    $region19: #{tpu_custom_call.1} parent=1 // pred_check_branch
      %53 = sbr.rel (0) target = $region21
    $region20: #{tpu_custom_call.1} parent=1 // pred_region
      _
    $region21: #{tpu_custom_call.1} parent=1 // pred_fallthru
      _
    // Predicated region
    $region22: #{tpu_custom_call.1} parent=1 // pred_check
      _
    $region23: #{tpu_custom_call.1} parent=1 // pred_check_branch
      %55 = sbr.rel (0) target = $region25
    $region24: #{tpu_custom_call.1} parent=1 // pred_region
      %57 = dma.done [#allocation3], 128
    $region25: #{tpu_custom_call.1} parent=1 // pred_fallthru
      _
    // Predicated region
    $region26: #{tpu_custom_call.1} parent=1 // pred_check
      _
    $region27: #{tpu_custom_call.1} parent=1 // pred_check_branch
      %59 = sbr.rel (0) target = $region29
    $region28: #{tpu_custom_call.1} parent=1 // pred_region
      %61 = dma.done [#allocation6], 2048
    $region29: #{tpu_custom_call.1} parent=1 // pred_fallthru
      _
    // Predicated region
    $region30: #{tpu_custom_call.1} parent=1 // pred_check
      _
    $region31: #{tpu_custom_call.1} parent=1 // pred_check_branch
      %63 = sbr.rel (0) target = $region33
    $region32: #{tpu_custom_call.1} parent=1 // pred_region
      %65 = dma.done [#allocation6], 2048
    $region33: #{tpu_custom_call.1} parent=1 // pred_fallthru
      _
    %v66 = vld [vmem:[#allocation2] sm:$0xff]
    %v67 = vld [vmem:[#allocation5] sm:$0xff]
    %v68 = vld [vmem:[#allocation5 + $0x8] sm:$0xff]
    %v69 = vld [vmem:[#allocation5 + $0x10] sm:$0xff]
    %v70 = vld [vmem:[#allocation5 + $0x18] sm:$0xff]
    %v71 = vld [vmem:[#allocation5 + $0x20] sm:$0xff]
    %v72 = vld [vmem:[#allocation5 + $0x28] sm:$0xff]
    %v73 = vld [vmem:[#allocation5 + $0x30] sm:$0xff]
    %v74 = vld [vmem:[#allocation5 + $0x38] sm:$0xff]
    %v75 = vld [vmem:[#allocation5 + $0x40] sm:$0xff]
    %v76 = vld [vmem:[#allocation5 + $0x48] sm:$0xff]
    %v77 = vld [vmem:[#allocation5 + $0x50] sm:$0xff]
    %v78 = vld [vmem:[#allocation5 + $0x58] sm:$0xff]
    %v79 = vld [vmem:[#allocation5 + $0x60] sm:$0xff]
    %v80 = vld [vmem:[#allocation5 + $0x68] sm:$0xff]
    %v81 = vld [vmem:[#allocation5 + $0x70] sm:$0xff]
    %v82 = vld [vmem:[#allocation5 + $0x78] sm:$0xff]
    %v83 = vld [vmem:[%s2] sm:$0x1]
    %v85 = vperm.slane %v83, 0
    %87 = vmatpush.msra.mxu0 %v82
    %88 = vmatpush.msra.mxu0 %v81
    %89 = vmatpush.msra.mxu0 %v80
    %90 = vmatpush.msra.mxu0 %v79
    %91 = vmatpush.msra.mxu0 %v78
    %92 = vmatpush.msra.mxu0 %v77
    %93 = vmatpush.msra.mxu0 %v76
    %94 = vmatpush.msra.mxu0 %v75
    %95 = vmatpush.msra.mxu0 %v74
    %96 = vmatpush.msra.mxu0 %v73
    %97 = vmatpush.msra.mxu0 %v72
    %98 = vmatpush.msra.mxu0 %v71
    %99 = vmatpush.msra.mxu0 %v70
    %100 = vmatpush.msra.mxu0 %v69
    %101 = vmatpush.msra.mxu0 %v68
    %102 = vmatpush.msra.mxu0 %v67
    %103 = vmatmul.f32.gmra.mxu0 %v66
    %v104 = vpop.f32.mrf.mxu0
    %v105 = vadd.f32 %v85, %v104
    %106 = vdwg.mxu0
    %v107 = vtanh.pop %v105
    %v108 = vld [vmem:[#allocation7] sm:$0xff]
    %v109 = vld [vmem:[#allocation7 + $0x8] sm:$0xff]
    %v110 = vld [vmem:[#allocation7 + $0x10] sm:$0xff]
    %v111 = vld [vmem:[#allocation7 + $0x18] sm:$0xff]
    %v112 = vld [vmem:[#allocation7 + $0x20] sm:$0xff]
    %v113 = vld [vmem:[#allocation7 + $0x28] sm:$0xff]
    %v114 = vld [vmem:[#allocation7 + $0x30] sm:$0xff]
    %v115 = vld [vmem:[#allocation7 + $0x38] sm:$0xff]
    %v116 = vld [vmem:[#allocation7 + $0x40] sm:$0xff]
    %v117 = vld [vmem:[#allocation7 + $0x48] sm:$0xff]
    %v118 = vld [vmem:[#allocation7 + $0x50] sm:$0xff]
    %v119 = vld [vmem:[#allocation7 + $0x58] sm:$0xff]
    %v120 = vld [vmem:[#allocation7 + $0x60] sm:$0xff]
    %v121 = vld [vmem:[#allocation7 + $0x68] sm:$0xff]
    %v122 = vld [vmem:[#allocation7 + $0x70] sm:$0xff]
    %v123 = vld [vmem:[#allocation7 + $0x78] sm:$0xff]
    %v124 = vld [vmem:[%s4] sm:$0x1]
    %v126 = vperm.slane %v124, 0
    %128 = vmatpush.msra.mxu0 %v123
    %129 = vmatpush.msra.mxu0 %v122
    %130 = vmatpush.msra.mxu0 %v121
    %131 = vmatpush.msra.mxu0 %v120
    %132 = vmatpush.msra.mxu0 %v119
    %133 = vmatpush.msra.mxu0 %v118
    %134 = vmatpush.msra.mxu0 %v117
    %135 = vmatpush.msra.mxu0 %v116
    %136 = vmatpush.msra.mxu0 %v115
    %137 = vmatpush.msra.mxu0 %v114
    %138 = vmatpush.msra.mxu0 %v113
    %139 = vmatpush.msra.mxu0 %v112
    %140 = vmatpush.msra.mxu0 %v111
    %141 = vmatpush.msra.mxu0 %v110
    %142 = vmatpush.msra.mxu0 %v109
    %143 = vmatpush.msra.mxu0 %v108
    %144 = vmatmul.f32.gmra.mxu0 %v107
    %v145 = vpop.f32.mrf.mxu0
    %v146 = vadd.f32 %v126, %v145
    %147 = vdwg.mxu0
    %148 = vst [vmem:[#allocation8] sm:$0xff] %v146
    // Predicated region
    $region34: #{tpu_custom_call.1} parent=1 // pred_check
      _
    $region35: #{tpu_custom_call.1} parent=1 // pred_check_branch
      %150 = sbr.rel (0) target = $region37
    $region36: #{tpu_custom_call.1} parent=1 // pred_region
      %152 = vsyncadd [#allocation4], 0
      %s154 = sshll.u32 [#allocation8], 4
      %s155 = int_to_ptr.vmem [resolvable:$true] %s154
      %s156 = sshll.u32 %s5, 4
      %s157 = int_to_ptr.hbm [resolvable:$true] %s156
      %159 = dma.vmem_to_hbm [thread:$0]  %s155, 128, %s157, [#allocation4]
    $region37: #{tpu_custom_call.1} parent=1 // pred_fallthru
      _
    // Predicated region
    $region38: #{tpu_custom_call.1} parent=1 // pred_check
      _
    $region39: #{tpu_custom_call.1} parent=1 // pred_check_branch
      %161 = sbr.rel (0) target = $region41
    $region40: #{tpu_custom_call.1} parent=1 // pred_region
      %163 = dma.done [#allocation4], 128
    $region41: #{tpu_custom_call.1} parent=1 // pred_fallthru
      _
    %164 = vsyncpa [#allocation3], 1
    %165 = vsyncpa [#allocation6], 1
    %166 = vsyncpa [#allocation4], 1

</llo_original>
